<compile_context>
chip_gen: v5e
topology: v5e:2x2
jax: 0.10.0
libtpu: 0.0.40
codegen_flags: <defaults>
</compile_context>

<pallas_src>
import functools

import jax
import jax.numpy as jnp
from jax import lax
from jax.experimental import pallas as pl
from jax.experimental.pallas import tpu as pltpu


def _r_to_dist_kernel(r_ref, w1_ref, b1_ref, wh_ref, bh_ref, out_ref):
    r = r_ref[...]                                            # (TB, r_dim)

    # Hidden layer: Linear + ReLU (MXU, f32 accumulate).
    h = jnp.dot(r, w1_ref[...], preferred_element_type=jnp.float32)
    h = jnp.maximum(h + b1_ref[...], 0.0)                     # (TB, h_dim)

    # Fused heads: single lane-dense matmul producing [mu | sigma_pre].
    y = jnp.dot(h, wh_ref[...], preferred_element_type=jnp.float32)
    y = y + bh_ref[...]                                       # (TB, 2*z_dim)

    # Sigma epilogue only on the second half of the lanes (column mask keeps
    # everything in-register; no cross-lane slice/concat).
    # softplus(x) = logaddexp(x, 0) is numerically stable.
    two_z = y.shape[-1]
    col = lax.broadcasted_iota(jnp.int32, y.shape, 1)
    sigma_val = 0.001 + 0.999 * jnp.logaddexp(y, 0.0)
    out = jnp.where(col >= (two_z // 2), sigma_val, y)
    out_ref[...] = out.astype(out_ref.dtype)


def prepare_params(w1, b1, wmu, bmu, ws, bs):
    """One-time parameter prep (call at init, NOT per forward pass).

    Inputs use the PyTorch convention: w* is (out, in), b* is (out,).
    Returns:
      w1_t    (r_dim, h_dim)
      b1_r    (1, h_dim)
      w_heads (h_dim, 2*z_dim) = [Wmu^T | Ws^T]
      b_heads (1, 2*z_dim)     = [bmu   | bs  ]
    """
    w1_t = jnp.asarray(w1).T
    b1_r = jnp.asarray(b1).reshape(1, -1)
    w_heads = jnp.concatenate([jnp.asarray(wmu).T, jnp.asarray(ws).T], axis=1)
    b_heads = jnp.concatenate([jnp.asarray(bmu), jnp.asarray(bs)]).reshape(1, -1)
    return w1_t, b1_r, w_heads, b_heads


@functools.partial(jax.jit, static_argnames=("block_b",))
def linear_r_to_dist(r, params, *, block_b=512):
    """r: (B, r_dim); params from prepare_params(). Returns (mu, sigma)."""
    w1_t, b1_r, w_heads, b_heads = params
    B, r_dim = r.shape
    h_dim = w1_t.shape[1]
    two_z = w_heads.shape[1]
    z_dim = two_z // 2

    # Batch tile: multiple of 8 sublanes; pad B so the grid divides evenly.
    tb = max(8, min(block_b, ((B + 7) // 8) * 8))
    tb = ((tb + 7) // 8) * 8
    b_pad = pl.cdiv(B, tb) * tb
    if b_pad != B:
        r = jnp.pad(r, ((0, b_pad - B), (0, 0)))

    itemsize = jnp.dtype(r.dtype).itemsize
    cost = pl.CostEstimate(
        flops=2 * B * (r_dim * h_dim + h_dim * two_z),
        transcendentals=B * two_z,
        bytes_accessed=itemsize * (B * r_dim + r_dim * h_dim + h_dim
                                   + h_dim * two_z + two_z + B * two_z),
    )

    out = pl.pallas_call(
        _r_to_dist_kernel,
        out_shape=jax.ShapeDtypeStruct((b_pad, two_z), r.dtype),
        grid_spec=pltpu.PrefetchScalarGridSpec(
            num_scalar_prefetch=0,
            grid=(b_pad // tb,),
            in_specs=[
                pl.BlockSpec((tb, r_dim), lambda i: (i, 0)),      # r tile (pipelined)
                pl.BlockSpec((r_dim, h_dim), lambda i: (0, 0)),   # W1^T   (resident)
                pl.BlockSpec((1, h_dim), lambda i: (0, 0)),       # b1     (resident)
                pl.BlockSpec((h_dim, two_z), lambda i: (0, 0)),   # [Wmu^T|Ws^T]
                pl.BlockSpec((1, two_z), lambda i: (0, 0)),       # [bmu|bs]
            ],
            out_specs=pl.BlockSpec((tb, two_z), lambda i: (i, 0)),
        ),
        compiler_params=pltpu.CompilerParams(
            dimension_semantics=("parallel",)),
        cost_estimate=cost,
    )(r, w1_t, b1_r, w_heads, b_heads)

    mu = out[:B, :z_dim]
    sigma = out[:B, z_dim:]
    return mu, sigma


def _reference(r, w1, b1, wmu, bmu, ws, bs):
    h = jnp.maximum(r @ w1.T + b1, 0.0)
    mu = h @ wmu.T + bmu
    sig = 0.001 + 0.999 * jax.nn.softplus(h @ ws.T + bs)
    return mu, sig


if __name__ == "__main__":
    batch, r_dim, h_dim, z_dim = 8, 32, 64, 16

    key = jax.random.PRNGKey(0)
    k = jax.random.split(key, 7)
    r   = jax.random.normal(k[0], (batch, r_dim), jnp.float32)
    w1  = jax.random.normal(k[1], (h_dim, r_dim), jnp.float32) * 0.1
    b1  = jax.random.normal(k[2], (h_dim,), jnp.float32) * 0.1
    wmu = jax.random.normal(k[3], (z_dim, h_dim), jnp.float32) * 0.1
    bmu = jax.random.normal(k[4], (z_dim,), jnp.float32) * 0.1
    ws  = jax.random.normal(k[5], (z_dim, h_dim), jnp.float32) * 0.1
    bs  = jax.random.normal(k[6], (z_dim,), jnp.float32) * 0.1

    # Init-time prep: transpose + fuse heads once (kept out of the hot path).
    params = prepare_params(w1, b1, wmu, bmu, ws, bs)

    mu, sigma = linear_r_to_dist(r, params)
    jax.block_until_ready((mu, sigma))

    mu_ref, sigma_ref = _reference(r, w1, b1, wmu, bmu, ws, bs)
    assert mu.shape == (batch, z_dim) and sigma.shape == (batch, z_dim)
    assert jnp.allclose(mu, mu_ref, atol=1e-5, rtol=1e-5)
    assert jnp.allclose(sigma, sigma_ref, atol=1e-5, rtol=1e-5)
    assert bool(jnp.all(sigma > 0.0))

    # Also exercise the padded-batch path (batch not a multiple of 8).
    r2 = jax.random.normal(k[0], (13, r_dim), jnp.float32)
    mu2, sigma2 = linear_r_to_dist(r2, params)
    jax.block_until_ready((mu2, sigma2))
    mu2_ref, sigma2_ref = _reference(r2, w1, b1, wmu, bmu, ws, bs)
    assert mu2.shape == (13, z_dim) and sigma2.shape == (13, z_dim)
    assert jnp.allclose(mu2, mu2_ref, atol=1e-5, rtol=1e-5)
    assert jnp.allclose(sigma2, sigma2_ref, atol=1e-5, rtol=1e-5)

    print("KERNEL_OK")
</pallas_src>

<mosaic_0001>
module attributes {stable_mosaic.version = 11 : i64} {
  func.func @_r_to_dist_kernel(%arg0: i32, %arg1: memref<8x32xf32, #tpu.memory_space<vmem>>, %arg2: memref<32x64xf32, #tpu.memory_space<vmem>>, %arg3: memref<1x64xf32, #tpu.memory_space<vmem>>, %arg4: memref<64x32xf32, #tpu.memory_space<vmem>>, %arg5: memref<1x32xf32, #tpu.memory_space<vmem>>, %arg6: memref<8x32xf32, #tpu.memory_space<vmem>>) attributes {dimension_semantics = [#tpu.dimension_semantics<parallel>], iteration_bounds = array<i64: 1>, scalar_prefetch = 0 : i64, scratch_operands = 0 : i64, tpu.core_type = #tpu.core_type<tc>, window_params = [{transform_indices = @transform_0, window_bounds = array<i64: 8, 32>}, {pipeline_mode = #tpu.pipeline_mode<synchronous>, transform_indices = @transform_1, window_bounds = array<i64: 32, 64>}, {pipeline_mode = #tpu.pipeline_mode<synchronous>, transform_indices = @transform_2, window_bounds = array<i64: 1, 64>}, {pipeline_mode = #tpu.pipeline_mode<synchronous>, transform_indices = @transform_3, window_bounds = array<i64: 64, 32>}, {pipeline_mode = #tpu.pipeline_mode<synchronous>, transform_indices = @transform_4, window_bounds = array<i64: 1, 32>}, {transform_indices = @transform_5, window_bounds = array<i64: 8, 32>}]} {
    %c0 = arith.constant 0 : index
    %c0_0 = arith.constant 0 : index
    %0 = vector.load %arg1[%c0, %c0_0] : memref<8x32xf32, #tpu.memory_space<vmem>>, vector<8x32xf32>
    %c0_1 = arith.constant 0 : index
    %c0_2 = arith.constant 0 : index
    %1 = vector.load %arg2[%c0_1, %c0_2] : memref<32x64xf32, #tpu.memory_space<vmem>>, vector<32x64xf32>
    %cst = arith.constant dense<0.000000e+00> : vector<8x64xf32>
    %2 = tpu.matmul %0, %1, %cst {dimension_numbers = #tpu.dot_dimension_numbers<[1], [0], [0], [1], [0, 0, 1, 1], [], []>} : vector<8x32xf32>, vector<32x64xf32>, vector<8x64xf32> -> vector<8x64xf32>
    %c0_3 = arith.constant 0 : index
    %c0_4 = arith.constant 0 : index
    %3 = vector.load %arg3[%c0_3, %c0_4] : memref<1x64xf32, #tpu.memory_space<vmem>>, vector<1x64xf32>
    %4 = vector.broadcast %3 : vector<1x64xf32> to vector<8x64xf32>
    %5 = arith.addf %2, %4 : vector<8x64xf32>
    %cst_5 = arith.constant 0.000000e+00 : f32
    %6 = vector.broadcast %cst_5 : f32 to vector<8x64xf32>
    %7 = arith.maximumf %5, %6 : vector<8x64xf32>
    %c0_6 = arith.constant 0 : index
    %c0_7 = arith.constant 0 : index
    %8 = vector.load %arg4[%c0_6, %c0_7] : memref<64x32xf32, #tpu.memory_space<vmem>>, vector<64x32xf32>
    %cst_8 = arith.constant dense<0.000000e+00> : vector<8x32xf32>
    %9 = tpu.matmul %7, %8, %cst_8 {dimension_numbers = #tpu.dot_dimension_numbers<[1], [0], [0], [1], [0, 0, 1, 1], [], []>} : vector<8x64xf32>, vector<64x32xf32>, vector<8x32xf32> -> vector<8x32xf32>
    %c0_9 = arith.constant 0 : index
    %c0_10 = arith.constant 0 : index
    %10 = vector.load %arg5[%c0_9, %c0_10] : memref<1x32xf32, #tpu.memory_space<vmem>>, vector<1x32xf32>
    %11 = vector.broadcast %10 : vector<1x32xf32> to vector<8x32xf32>
    %12 = arith.addf %9, %11 : vector<8x32xf32>
    %13 = tpu.iota {dimensions = array<i32: 1>} : vector<8x32xi32>
    %cst_11 = arith.constant 0.000000e+00 : f32
    %14 = vector.broadcast %cst_11 : f32 to vector<8x32xf32>
    %15 = arith.maximumf %12, %14 : vector<8x32xf32>
    %16 = vector.broadcast %cst_11 : f32 to vector<8x32xf32>
    %17 = arith.subf %12, %16 : vector<8x32xf32>
    %18 = arith.cmpf one, %17, %17 : vector<8x32xf32>
    %19 = vector.broadcast %cst_11 : f32 to vector<8x32xf32>
    %20 = arith.addf %12, %19 : vector<8x32xf32>
    %21 = math.absf %17 : vector<8x32xf32>
    %cst_12 = arith.constant 0.000000e+00 : f32
    %22 = vector.broadcast %cst_12 : f32 to vector<8x32xf32>
    %23 = arith.subf %22, %21 : vector<8x32xf32>
    %24 = math.exp %23 : vector<8x32xf32>
    %25 = math.log1p %24 : vector<8x32xf32>
    %26 = arith.addf %15, %25 : vector<8x32xf32>
    %27 = arith.select %18, %20, %26 : vector<8x32xi1>, vector<8x32xf32>
    %cst_13 = arith.constant 9.990000e-01 : f32
    %28 = vector.broadcast %cst_13 : f32 to vector<8x32xf32>
    %29 = arith.mulf %28, %27 : vector<8x32xf32>
    %cst_14 = arith.constant 1.000000e-03 : f32
    %30 = vector.broadcast %cst_14 : f32 to vector<8x32xf32>
    %31 = arith.addf %30, %29 : vector<8x32xf32>
    %c16_i32 = arith.constant 16 : i32
    %32 = vector.broadcast %c16_i32 : i32 to vector<8x32xi32>
    %33 = arith.cmpi sge, %13, %32 : vector<8x32xi32>
    %34 = arith.select %33, %31, %12 : vector<8x32xi1>, vector<8x32xf32>
    %c0_15 = arith.constant 0 : index
    %c0_16 = arith.constant 0 : index
    %35 = vector.load %arg6[%c0_15, %c0_16] : memref<8x32xf32, #tpu.memory_space<vmem>>, vector<8x32xf32>
    tpu.vector_store %arg6[%c0_15, %c0_16], %34 {strides = array<i32>} : memref<8x32xf32, #tpu.memory_space<vmem>>, vector<8x32xf32>,
    return
  }
  func.func @transform_0(%arg0: i32) -> (i32, i32) {
    %c0_i32 = arith.constant 0 : i32
    %c0_i32_0 = arith.constant 0 : i32
    return %arg0, %c0_i32 : i32, i32
  }
  func.func @transform_1(%arg0: i32) -> (i32, i32) {
    %c0_i32 = arith.constant 0 : i32
    %c0_i32_0 = arith.constant 0 : i32
    %c0_i32_1 = arith.constant 0 : i32
    return %c0_i32, %c0_i32_0 : i32, i32
  }
  func.func @transform_2(%arg0: i32) -> (i32, i32) {
    %c0_i32 = arith.constant 0 : i32
    %c0_i32_0 = arith.constant 0 : i32
    %c0_i32_1 = arith.constant 0 : i32
    return %c0_i32, %c0_i32_0 : i32, i32
  }
  func.func @transform_3(%arg0: i32) -> (i32, i32) {
    %c0_i32 = arith.constant 0 : i32
    %c0_i32_0 = arith.constant 0 : i32
    %c0_i32_1 = arith.constant 0 : i32
    return %c0_i32, %c0_i32_0 : i32, i32
  }
  func.func @transform_4(%arg0: i32) -> (i32, i32) {
    %c0_i32 = arith.constant 0 : i32
    %c0_i32_0 = arith.constant 0 : i32
    %c0_i32_1 = arith.constant 0 : i32
    return %c0_i32, %c0_i32_0 : i32, i32
  }
  func.func @transform_5(%arg0: i32) -> (i32, i32) {
    %c0_i32 = arith.constant 0 : i32
    %c0_i32_0 = arith.constant 0 : i32
    return %arg0, %c0_i32 : i32, i32
  }
}

</mosaic_0001>

<llo_original>
// kernel: linear_r_to_dist.1
$region0: #{linear_r_to_dist.1}
  #allocation0 [shape = 'u32[]', space=smem, size = 0x4, offset = 0x4, fixed_abs, tag = 'smem constant byte address 0x4 - core index']
  #allocation1 [shape = 'u32[72,128]{1,0:T(1,128)}', space=vmem, size = 0x9000, scoped, tag = 'internal scratch']
  %s0 = inlined_call_operand.vmem [shape: f32[8,32], index: 0, kind: input, shape index: {}]
  %s1 = inlined_call_operand.vmem [shape: f32[32,64], index: 1, kind: input, shape index: {}]
  %s2 = inlined_call_operand.vmem [shape: f32[1,64], index: 2, kind: input, shape index: {}]
  %s3 = inlined_call_operand.vmem [shape: f32[64,32], index: 3, kind: input, shape index: {}]
  %s4 = inlined_call_operand.vmem [shape: f32[1,32], index: 4, kind: input, shape index: {}]
  %s5 = inlined_call_operand.vmem [shape: f32[8,32], index: 5, kind: output, shape index: {}]
  %s6 = sld [smem:[#allocation0]]
  $region30: #{linear_r_to_dist.1} parent=0
    _
  %s8 = ssub.s32 1, %s6
  %s9 = scalar_select 0, %s8, %s6
  // Predicated region
  $region2: #{linear_r_to_dist.1} parent=0 // pred_check
    _
  $region3: #{linear_r_to_dist.1} parent=0 // pred_check_branch
    %11 = sbr.rel (0) target = $region5
  $region4: #{linear_r_to_dist.1} parent=0 // pred_region
    _
  $region5: #{linear_r_to_dist.1} parent=0 // pred_fallthru
    _
  // Predicated region
  $region6: #{linear_r_to_dist.1} parent=0 // pred_check
    _
  $region7: #{linear_r_to_dist.1} parent=0 // pred_check_branch
    %13 = sbr.rel (0) target = $region9
  $region8: #{linear_r_to_dist.1} parent=0 // pred_region
    _
  $region9: #{linear_r_to_dist.1} parent=0 // pred_fallthru
    _
  // Predicated region
  $region10: #{linear_r_to_dist.1} parent=0 // pred_check
    _
  $region11: #{linear_r_to_dist.1} parent=0 // pred_check_branch
    %15 = sbr.rel (0) target = $region13
  $region12: #{linear_r_to_dist.1} parent=0 // pred_region
    _
  $region13: #{linear_r_to_dist.1} parent=0 // pred_fallthru
    _
  // Predicated region
  $region14: #{linear_r_to_dist.1} parent=0 // pred_check
    _
  $region15: #{linear_r_to_dist.1} parent=0 // pred_check_branch
    %17 = sbr.rel (0) target = $region17
  $region16: #{linear_r_to_dist.1} parent=0 // pred_region
    _
  $region17: #{linear_r_to_dist.1} parent=0 // pred_fallthru
    _
  // Predicated region
  $region18: #{linear_r_to_dist.1} parent=0 // pred_check
    _
  $region19: #{linear_r_to_dist.1} parent=0 // pred_check_branch
    %19 = sbr.rel (0) target = $region21
  $region20: #{linear_r_to_dist.1} parent=0 // pred_region
    _
  $region21: #{linear_r_to_dist.1} parent=0 // pred_fallthru
    _
  %v20 = vld [vmem:[%s0] sm:$0xff]
  %v21 = vld [vmem:[%s1] sm:$0xff]
  %v22 = vld [vmem:[%s1 + $0x8] sm:$0xff]
  %v23 = vld [vmem:[%s1 + $0x10] sm:$0xff]
  %v24 = vld [vmem:[%s1 + $0x18] sm:$0xff]
  %v25 = vld [vmem:[%s2] sm:$0x1]
  %v27 = vperm.slane %v25, 0
  %vm29 = vcmask 261120
  %v31 = vsel %vm29, %v20, 0
  %33 = vmatpush.msra.mxu0 0.0
  %34 = vmatpush.msra.mxu0 0.0
  %35 = vmatpush.msra.mxu0 0.0
  %36 = vmatpush.msra.mxu0 0.0
  %37 = vmatpush.msra.mxu0 0.0
  %38 = vmatpush.msra.mxu0 0.0
  %39 = vmatpush.msra.mxu0 0.0
  %40 = vmatpush.msra.mxu0 0.0
  %41 = vmatpush.msra.mxu0 0.0
  %42 = vmatpush.msra.mxu0 0.0
  %43 = vmatpush.msra.mxu0 0.0
  %44 = vmatpush.msra.mxu0 0.0
  %45 = vmatpush.msra.mxu0 %v24
  %46 = vmatpush.msra.mxu0 %v23
  %47 = vmatpush.msra.mxu0 %v22
  %48 = vmatpush.msra.mxu0 %v21
  %49 = vmatmul.f32.gmra.mxu0 %v31
  %v50 = vpop.f32.mrf.mxu0
  %v51 = vadd.f32 %v27, %v50
  %52 = vdwg.mxu0
  %v53 = vmax.f32 %v51, 0.0
  %v54 = vld [vmem:[%s3] sm:$0xff]
  %v55 = vld [vmem:[%s3 + $0x8] sm:$0xff]
  %v56 = vld [vmem:[%s3 + $0x10] sm:$0xff]
  %v57 = vld [vmem:[%s3 + $0x18] sm:$0xff]
  %v58 = vld [vmem:[%s3 + $0x20] sm:$0xff]
  %v59 = vld [vmem:[%s3 + $0x28] sm:$0xff]
  %v60 = vld [vmem:[%s3 + $0x30] sm:$0xff]
  %v61 = vld [vmem:[%s3 + $0x38] sm:$0xff]
  %v62 = vld [vmem:[%s4] sm:$0x1]
  %v64 = vperm.slane %v62, 0
  %vm66 = vcmask 523264
  %v68 = vsel %vm66, %v53, 0
  %70 = vmatpush.msra.mxu0 0.0
  %71 = vmatpush.msra.mxu0 0.0
  %72 = vmatpush.msra.mxu0 0.0
  %73 = vmatpush.msra.mxu0 0.0
  %74 = vmatpush.msra.mxu0 0.0
  %75 = vmatpush.msra.mxu0 0.0
  %76 = vmatpush.msra.mxu0 0.0
  %77 = vmatpush.msra.mxu0 0.0
  %78 = vmatpush.msra.mxu0 %v61
  %79 = vmatpush.msra.mxu0 %v60
  %80 = vmatpush.msra.mxu0 %v59
  %81 = vmatpush.msra.mxu0 %v58
  %82 = vmatpush.msra.mxu0 %v57
  %83 = vmatpush.msra.mxu0 %v56
  %84 = vmatpush.msra.mxu0 %v55
  %85 = vmatpush.msra.mxu0 %v54
  %86 = vmatmul.f32.gmra.mxu0 %v68
  %v87 = vpop.f32.mrf.mxu0
  %v88 = vadd.f32 %v64, %v87
  %89 = vdwg.mxu0
  %v90 = vlaneseq
  %v91 = vand.u32 %v90, 127
  %v92 = vmax.f32 %v88, 0.0
  %vm93 = vcmp.ne.f32.partialorder %v88, %v88
  %v94 = vadd.f32 %v88, 0.0
  %v95 = vand.u32 2147483647, %v88
  %v96 = vsub.f32 0.0, %v95
  %v97 = vmul.f32 %v96, 1.442695
  %v98 = vpow.pop %v97
  %v99 = vadd.f32 %v98, 1.0
  %v100 = vlog2.pop %v99
  %v101 = vmul.f32 %v100, 0.6931472
  %v102 = vmul.f32 -0.5, %v98
  %v103 = vadd.f32 %v102, 1.0
  %v104 = vmul.f32 %v103, %v98
  %v105 = vand.u32 2147483647, %v98
  %vm106 = vcmp.lt.f32.partialorder %v105, 0.0004427343
  %v107 = vsel %vm106, %v104, %v101
  %v108 = vadd.f32 %v92, %v107
  %v109 = vsel %vm93, %v94, %v108
  %v110 = vmul.f32 %v109, 0.999
  %v111 = vadd.f32 %v110, 0.001
  %vm112 = vcmp.ge.s32.totalorder %v91, 16
  %v113 = vsel %vm112, %v111, %v88
  %114 = vst.msk [vmem:[%s5] sm:$0xff] %vm29, %v113
  // Predicated region
  $region22: #{linear_r_to_dist.1} parent=0 // pred_check
    _
  $region23: #{linear_r_to_dist.1} parent=0 // pred_check_branch
    %116 = sbr.rel (0) target = $region25
  $region24: #{linear_r_to_dist.1} parent=0 // pred_region
    _
  $region25: #{linear_r_to_dist.1} parent=0 // pred_fallthru
    _
  // Predicated region
  $region26: #{linear_r_to_dist.1} parent=0 // pred_check
    _
  $region27: #{linear_r_to_dist.1} parent=0 // pred_check_branch
    %118 = sbr.rel (0) target = $region29
  $region28: #{linear_r_to_dist.1} parent=0 // pred_region
    _
  $region29: #{linear_r_to_dist.1} parent=0 // pred_fallthru
    _

</llo_original>
